<compile_context>
chip_gen: v7x
topology: tpu7x:2x2x1
jax: 0.10.0
libtpu: 0.0.40
codegen_flags: <defaults>
</compile_context>

<pallas_src>
import math

import jax
import jax.numpy as jnp
from jax import lax
from jax.experimental import pallas as pl
from jax.experimental.pallas import tpu as pltpu

FEATURE_PYRAMID_CHANNELS = 12
PE_CHANNELS = 6
DECODER_INPUT_CHANNELS = FEATURE_PYRAMID_CHANNELS * 5 + PE_CHANNELS * 2 + 1  # 73
HIDDEN = 64
OUT_CHANNELS = 3


def _gelu_tanh(x):
    # tanh-approx GELU: one EUP transcendental + a handful of VALU ops per
    # element (vs ~40 VALU ops for the exact-erf polynomial). Deviates from
    # PyTorch's exact GELU by <~1e-3; covered by the test tolerance.
    c = 0.7978845608028654  # sqrt(2/pi)
    return 0.5 * x * (1.0 + jnp.tanh(c * (x + 0.044715 * (x * x * x))))


def _gelu_exact(x):
    # Exact (erf) GELU — used only by the pure-f32 reference (PyTorch default).
    return 0.5 * x * (1.0 + lax.erf(x * (1.0 / math.sqrt(2.0))))


def _decoder_kernel(x_ref, w1_ref, b1_ref, w2_ref, b2_ref, w3_ref, b3_ref, o_ref):
    # x:  (tn, 73)  f32   native row-major block; cast to bf16 in-kernel
    # w*: (out, in) bf16
    # b*: (out, 1)  f32   broadcast along lanes
    # o:  (3, tn)   f32   lane-dense stores
    x = x_ref[...].astype(jnp.bfloat16)

    # Layer 1: contract both operands on their last (channel) dim:
    # (64, 73) . (tn, 73)^T -> (64, tn). Batch lands on lanes, so all
    # downstream VPU/EUP work uses the full 128-lane width.
    h = lax.dot_general(
        w1_ref[...], x, (((1,), (1,)), ((), ())),
        preferred_element_type=jnp.float32) + b1_ref[...]
    h = _gelu_tanh(h)

    # Layer 2: (64, 64) @ (64, tn), bf16 MXU operands, f32 accumulate.
    h = jnp.dot(w2_ref[...], h.astype(jnp.bfloat16),
                preferred_element_type=jnp.float32) + b2_ref[...]
    h = _gelu_tanh(h)
    # TODO(synk): on v6e/v7x the elementwise chain could run in bf16 (2x packed
    # VPU throughput) gated on pltpu.get_tpu_info(); kept f32 for v5e compat.

    # Layer 3: (3, 64) @ (64, tn) + sigmoid (EUP).
    h = jnp.dot(w3_ref[...], h.astype(jnp.bfloat16),
                preferred_element_type=jnp.float32) + b3_ref[...]
    o_ref[...] = jax.nn.sigmoid(h).astype(o_ref.dtype)


def color_decoder(x, params, *, tile_n=8192):
    """x: (N, 73) float32. Returns (N, 3) float32 (matches nn.Module forward)."""
    w1, b1, w2, b2, w3, b3 = params
    N, C = x.shape
    assert C == DECODER_INPUT_CHANNELS

    # Lane tile: multiple of 128, default 8192; capped so the grid keeps >= 4
    # steps when N allows (keeps both v7x TensorCores fed + pipeline overlap).
    tn = max(128, (tile_n // 128) * 128)
    tn = min(tn, max(128, (N // 4) // 128 * 128))
    n_pad = pl.cdiv(N, tn) * tn
    grid = (n_pad // tn,)

    # Only a row-pad when needed — no transpose / dtype-convert HBM pass.
    if n_pad != N:
        x = jnp.pad(x, ((0, n_pad - N), (0, 0)))

    w1b = w1.astype(jnp.bfloat16)
    w2b = w2.astype(jnp.bfloat16)
    w3b = w3.astype(jnp.bfloat16)

    x_spec = pl.BlockSpec((tn, C), lambda i: (i, 0))
    w1_spec = pl.BlockSpec((HIDDEN, C), lambda i: (0, 0))
    b1_spec = pl.BlockSpec((HIDDEN, 1), lambda i: (0, 0))
    w2_spec = pl.BlockSpec((HIDDEN, HIDDEN), lambda i: (0, 0))
    b2_spec = pl.BlockSpec((HIDDEN, 1), lambda i: (0, 0))
    w3_spec = pl.BlockSpec((OUT_CHANNELS, HIDDEN), lambda i: (0, 0))
    b3_spec = pl.BlockSpec((OUT_CHANNELS, 1), lambda i: (0, 0))
    o_spec = pl.BlockSpec((OUT_CHANNELS, tn), lambda i: (0, i))

    flops = 2 * n_pad * (C * HIDDEN + HIDDEN * HIDDEN + HIDDEN * OUT_CHANNELS)
    transcendentals = n_pad * (HIDDEN + HIDDEN + OUT_CHANNELS)
    bytes_accessed = (
        n_pad * C * 4                      # f32 input
        + n_pad * OUT_CHANNELS * 4         # f32 output
        + 2 * (C * HIDDEN + HIDDEN * HIDDEN + HIDDEN * OUT_CHANNELS)  # bf16 weights
        + 4 * (HIDDEN + HIDDEN + OUT_CHANNELS)                        # f32 biases
    )

    # Explicit VMEM budget: double-buffered in/out blocks + (64, tn) f32/bf16
    # intermediates, with headroom; capped at v7x's 64 MiB physical VMEM.
    vmem_bytes = (2 * tn * C * 4
                  + 2 * OUT_CHANNELS * tn * 4
                  + 10 * HIDDEN * tn * 4
                  + (2 << 20))
    vmem_limit = int(min(max(vmem_bytes, 32 << 20), 64 << 20))

    out_t = pl.pallas_call(
        _decoder_kernel,
        out_shape=jax.ShapeDtypeStruct((OUT_CHANNELS, n_pad), jnp.float32),
        grid_spec=pltpu.PrefetchScalarGridSpec(
            num_scalar_prefetch=0,
            grid=grid,
            in_specs=[x_spec, w1_spec, b1_spec, w2_spec, b2_spec, w3_spec, b3_spec],
            out_specs=o_spec,
        ),
        compiler_params=pltpu.CompilerParams(
            dimension_semantics=("parallel",),
            vmem_limit_bytes=vmem_limit,
        ),
        cost_estimate=pl.CostEstimate(
            flops=flops,
            transcendentals=transcendentals,
            bytes_accessed=bytes_accessed,
        ),
    )(x, w1b, b1, w2b, b2, w3b, b3)

    # (3, n_pad) -> (N, 3); padded rows sliced off. Consumers that accept the
    # lane-dense (3, N) slab can take out_t[:, :N] directly and skip this.
    return out_t.T[:N]


def init_params(key):
    """nn.Linear-style init. Weights (out_features, in_features); biases (out, 1)."""
    def linear_init(k, fan_in, fan_out):
        kw, kb = jax.random.split(k)
        bound = 1.0 / math.sqrt(fan_in)
        w = jax.random.uniform(kw, (fan_out, fan_in), jnp.float32, -bound, bound)
        b = jax.random.uniform(kb, (fan_out, 1), jnp.float32, -bound, bound)
        return w, b

    k1, k2, k3 = jax.random.split(key, 3)
    w1, b1 = linear_init(k1, DECODER_INPUT_CHANNELS, HIDDEN)
    w2, b2 = linear_init(k2, HIDDEN, HIDDEN)
    w3, b3 = linear_init(k3, HIDDEN, OUT_CHANNELS)
    return (w1, b1, w2, b2, w3, b3)


def _reference(x, params):
    # Pure-f32 reference with PyTorch semantics (exact-erf GELU, y = x @ W.T + b).
    w1, b1, w2, b2, w3, b3 = params
    h = _gelu_exact(x @ w1.T + b1[:, 0])
    h = _gelu_exact(h @ w2.T + b2[:, 0])
    return jax.nn.sigmoid(h @ w3.T + b3[:, 0])


if __name__ == "__main__":
    key = jax.random.PRNGKey(0)
    kx, kp = jax.random.split(key)

    N = 500  # small, non-multiple-of-128 -> exercises padding and the grid>=4 cap
    x = jax.random.normal(kx, (N, DECODER_INPUT_CHANNELS), dtype=jnp.float32)
    params = init_params(kp)

    out = jax.block_until_ready(color_decoder(x, params))
    ref = jax.block_until_ready(_reference(x, params))

    assert out.shape == (N, OUT_CHANNELS)
    # bf16 MXU operands (f32 accumulate) + tanh-approx GELU vs. exact-erf f32
    # reference -> loosened tolerance; sigmoid output is in [0, 1].
    max_err = float(jnp.max(jnp.abs(out - ref)))
    assert jnp.allclose(out, ref, atol=3e-2, rtol=3e-2), max_err

    print("KERNEL_OK")
</pallas_src>

<mosaic_0001>
module attributes {stable_mosaic.version = 11 : i64} {
  func.func @_decoder_kernel(%arg0: i32, %arg1: memref<128x73xf32, #tpu.memory_space<vmem>>, %arg2: memref<64x73xbf16, #tpu.memory_space<vmem>>, %arg3: memref<64x1xf32, #tpu.memory_space<vmem>>, %arg4: memref<64x64xbf16, #tpu.memory_space<vmem>>, %arg5: memref<64x1xf32, #tpu.memory_space<vmem>>, %arg6: memref<3x64xbf16, #tpu.memory_space<vmem>>, %arg7: memref<3x1xf32, #tpu.memory_space<vmem>>, %arg8: memref<3x128xf32, #tpu.memory_space<vmem>>) attributes {dimension_semantics = [#tpu.dimension_semantics<parallel>], iteration_bounds = array<i64: 4>, scalar_prefetch = 0 : i64, scratch_operands = 0 : i64, tpu.core_type = #tpu.core_type<tc>, window_params = [{transform_indices = @transform_0, window_bounds = array<i64: 128, 73>}, {pipeline_mode = #tpu.pipeline_mode<synchronous>, transform_indices = @transform_1, window_bounds = array<i64: 64, 73>}, {pipeline_mode = #tpu.pipeline_mode<synchronous>, transform_indices = @transform_2, window_bounds = array<i64: 64, 1>}, {pipeline_mode = #tpu.pipeline_mode<synchronous>, transform_indices = @transform_3, window_bounds = array<i64: 64, 64>}, {pipeline_mode = #tpu.pipeline_mode<synchronous>, transform_indices = @transform_4, window_bounds = array<i64: 64, 1>}, {pipeline_mode = #tpu.pipeline_mode<synchronous>, transform_indices = @transform_5, window_bounds = array<i64: 3, 64>}, {pipeline_mode = #tpu.pipeline_mode<synchronous>, transform_indices = @transform_6, window_bounds = array<i64: 3, 1>}, {transform_indices = @transform_7, window_bounds = array<i64: 3, 128>}]} {
    %c0 = arith.constant 0 : index
    %c0_0 = arith.constant 0 : index
    %0 = vector.load %arg1[%c0, %c0_0] : memref<128x73xf32, #tpu.memory_space<vmem>>, vector<128x73xf32>
    %1 = arith.truncf %0 : vector<128x73xf32> to vector<128x73xbf16>
    %c0_1 = arith.constant 0 : index
    %c0_2 = arith.constant 0 : index
    %2 = vector.load %arg2[%c0_1, %c0_2] : memref<64x73xbf16, #tpu.memory_space<vmem>>, vector<64x73xbf16>
    %cst = arith.constant dense<0.000000e+00> : vector<64x128xf32>
    %3 = tpu.matmul %2, %1, %cst {dimension_numbers = #tpu.dot_dimension_numbers<[1], [1], [0], [0], [0, 0, 1, 0], [], []>} : vector<64x73xbf16>, vector<128x73xbf16>, vector<64x128xf32> -> vector<64x128xf32>
    %c0_3 = arith.constant 0 : index
    %c0_4 = arith.constant 0 : index
    %4 = vector.load %arg3[%c0_3, %c0_4] : memref<64x1xf32, #tpu.memory_space<vmem>>, vector<64x1xf32>
    %5 = vector.broadcast %4 : vector<64x1xf32> to vector<64x128xf32>
    %6 = arith.addf %3, %5 : vector<64x128xf32>
    %cst_5 = arith.constant 5.000000e-01 : f32
    %7 = vector.broadcast %cst_5 : f32 to vector<64x128xf32>
    %8 = arith.mulf %7, %6 : vector<64x128xf32>
    %9 = arith.mulf %6, %6 : vector<64x128xf32>
    %10 = arith.mulf %9, %6 : vector<64x128xf32>
    %cst_6 = arith.constant 4.471500e-02 : f32
    %11 = vector.broadcast %cst_6 : f32 to vector<64x128xf32>
    %12 = arith.mulf %11, %10 : vector<64x128xf32>
    %13 = arith.addf %6, %12 : vector<64x128xf32>
    %cst_7 = arith.constant 0.797884583 : f32
    %14 = vector.broadcast %cst_7 : f32 to vector<64x128xf32>
    %15 = arith.mulf %14, %13 : vector<64x128xf32>
    %16 = math.tanh %15 : vector<64x128xf32>
    %cst_8 = arith.constant 1.000000e+00 : f32
    %17 = vector.broadcast %cst_8 : f32 to vector<64x128xf32>
    %18 = arith.addf %17, %16 : vector<64x128xf32>
    %19 = arith.mulf %8, %18 : vector<64x128xf32>
    %c0_9 = arith.constant 0 : index
    %c0_10 = arith.constant 0 : index
    %20 = vector.load %arg4[%c0_9, %c0_10] : memref<64x64xbf16, #tpu.memory_space<vmem>>, vector<64x64xbf16>
    %21 = arith.truncf %19 : vector<64x128xf32> to vector<64x128xbf16>
    %cst_11 = arith.constant dense<0.000000e+00> : vector<64x128xf32>
    %22 = tpu.matmul %20, %21, %cst_11 {dimension_numbers = #tpu.dot_dimension_numbers<[1], [0], [0], [1], [0, 0, 1, 1], [], []>} : vector<64x64xbf16>, vector<64x128xbf16>, vector<64x128xf32> -> vector<64x128xf32>
    %c0_12 = arith.constant 0 : index
    %c0_13 = arith.constant 0 : index
    %23 = vector.load %arg5[%c0_12, %c0_13] : memref<64x1xf32, #tpu.memory_space<vmem>>, vector<64x1xf32>
    %24 = vector.broadcast %23 : vector<64x1xf32> to vector<64x128xf32>
    %25 = arith.addf %22, %24 : vector<64x128xf32>
    %cst_14 = arith.constant 5.000000e-01 : f32
    %26 = vector.broadcast %cst_14 : f32 to vector<64x128xf32>
    %27 = arith.mulf %26, %25 : vector<64x128xf32>
    %28 = arith.mulf %25, %25 : vector<64x128xf32>
    %29 = arith.mulf %28, %25 : vector<64x128xf32>
    %cst_15 = arith.constant 4.471500e-02 : f32
    %30 = vector.broadcast %cst_15 : f32 to vector<64x128xf32>
    %31 = arith.mulf %30, %29 : vector<64x128xf32>
    %32 = arith.addf %25, %31 : vector<64x128xf32>
    %cst_16 = arith.constant 0.797884583 : f32
    %33 = vector.broadcast %cst_16 : f32 to vector<64x128xf32>
    %34 = arith.mulf %33, %32 : vector<64x128xf32>
    %35 = math.tanh %34 : vector<64x128xf32>
    %cst_17 = arith.constant 1.000000e+00 : f32
    %36 = vector.broadcast %cst_17 : f32 to vector<64x128xf32>
    %37 = arith.addf %36, %35 : vector<64x128xf32>
    %38 = arith.mulf %27, %37 : vector<64x128xf32>
    %c0_18 = arith.constant 0 : index
    %c0_19 = arith.constant 0 : index
    %39 = vector.load %arg6[%c0_18, %c0_19] : memref<3x64xbf16, #tpu.memory_space<vmem>>, vector<3x64xbf16>
    %40 = arith.truncf %38 : vector<64x128xf32> to vector<64x128xbf16>
    %cst_20 = arith.constant dense<0.000000e+00> : vector<3x128xf32>
    %41 = tpu.matmul %39, %40, %cst_20 {dimension_numbers = #tpu.dot_dimension_numbers<[1], [0], [0], [1], [0, 0, 1, 1], [], []>} : vector<3x64xbf16>, vector<64x128xbf16>, vector<3x128xf32> -> vector<3x128xf32>
    %c0_21 = arith.constant 0 : index
    %c0_22 = arith.constant 0 : index
    %42 = vector.load %arg7[%c0_21, %c0_22] : memref<3x1xf32, #tpu.memory_space<vmem>>, vector<3x1xf32>
    %43 = vector.broadcast %42 : vector<3x1xf32> to vector<3x128xf32>
    %44 = arith.addf %41, %43 : vector<3x128xf32>
    %45 = arith.negf %44 : vector<3x128xf32>
    %46 = math.exp %45 : vector<3x128xf32>
    %cst_23 = arith.constant 1.000000e+00 : f32
    %47 = vector.broadcast %cst_23 : f32 to vector<3x128xf32>
    %48 = arith.addf %47, %46 : vector<3x128xf32>
    %49 = arith.divf %47, %48 : vector<3x128xf32>
    %c0_24 = arith.constant 0 : index
    %c0_25 = arith.constant 0 : index
    %50 = vector.load %arg8[%c0_24, %c0_25] : memref<3x128xf32, #tpu.memory_space<vmem>>, vector<3x128xf32>
    tpu.vector_store %arg8[%c0_24, %c0_25], %49 {strides = array<i32>} : memref<3x128xf32, #tpu.memory_space<vmem>>, vector<3x128xf32>,
    return
  }
  func.func @transform_0(%arg0: i32) -> (i32, i32) {
    %c0_i32 = arith.constant 0 : i32
    %c0_i32_0 = arith.constant 0 : i32
    return %arg0, %c0_i32 : i32, i32
  }
  func.func @transform_1(%arg0: i32) -> (i32, i32) {
    %c0_i32 = arith.constant 0 : i32
    %c0_i32_0 = arith.constant 0 : i32
    %c0_i32_1 = arith.constant 0 : i32
    return %c0_i32, %c0_i32_0 : i32, i32
  }
  func.func @transform_2(%arg0: i32) -> (i32, i32) {
    %c0_i32 = arith.constant 0 : i32
    %c0_i32_0 = arith.constant 0 : i32
    %c0_i32_1 = arith.constant 0 : i32
    return %c0_i32, %c0_i32_0 : i32, i32
  }
  func.func @transform_3(%arg0: i32) -> (i32, i32) {
    %c0_i32 = arith.constant 0 : i32
    %c0_i32_0 = arith.constant 0 : i32
    %c0_i32_1 = arith.constant 0 : i32
    return %c0_i32, %c0_i32_0 : i32, i32
  }
  func.func @transform_4(%arg0: i32) -> (i32, i32) {
    %c0_i32 = arith.constant 0 : i32
    %c0_i32_0 = arith.constant 0 : i32
    %c0_i32_1 = arith.constant 0 : i32
    return %c0_i32, %c0_i32_0 : i32, i32
  }
  func.func @transform_5(%arg0: i32) -> (i32, i32) {
    %c0_i32 = arith.constant 0 : i32
    %c0_i32_0 = arith.constant 0 : i32
    %c0_i32_1 = arith.constant 0 : i32
    return %c0_i32, %c0_i32_0 : i32, i32
  }
  func.func @transform_6(%arg0: i32) -> (i32, i32) {
    %c0_i32 = arith.constant 0 : i32
    %c0_i32_0 = arith.constant 0 : i32
    %c0_i32_1 = arith.constant 0 : i32
    return %c0_i32, %c0_i32_0 : i32, i32
  }
  func.func @transform_7(%arg0: i32) -> (i32, i32) {
    %c0_i32 = arith.constant 0 : i32
    %c0_i32_0 = arith.constant 0 : i32
    return %c0_i32, %arg0 : i32, i32
  }
}

</mosaic_0001>

<llo_original>
// kernel: tpu_custom_call.1
$region0: #{tpu_custom_call.1}
  #allocation0 [shape = 'u32[]', space=smem, size = 0x4, offset = 0x4, fixed_abs, tag = 'smem constant byte address 0x4 - core index']
  #allocation1 [shape = 'u32[144,128]{1,0:T(1,128)}', space=vmem, size = 0x12000, scoped, tag = 'internal scratch']
  %s0 = inlined_call_operand.vmem [shape: f32[512,73], index: 0, kind: input, shape index: {}]
  %s1 = inlined_call_operand.vmem [shape: bf16[64,73], index: 1, kind: input, shape index: {}]
  %s2 = inlined_call_operand.vmem [shape: f32[64,1], index: 2, kind: input, shape index: {}]
  %s3 = inlined_call_operand.vmem [shape: bf16[64,64], index: 3, kind: input, shape index: {}]
  %s4 = inlined_call_operand.vmem [shape: f32[64,1], index: 4, kind: input, shape index: {}]
  %s5 = inlined_call_operand.vmem [shape: bf16[3,64], index: 5, kind: input, shape index: {}]
  %s6 = inlined_call_operand.vmem [shape: f32[3,1], index: 6, kind: input, shape index: {}]
  %s7 = inlined_call_operand.hbm [shape: f32[3,512], index: 7, kind: output, shape index: {}]
  %s8 = sld [smem:[#allocation0]]
  $region61: #{tpu_custom_call.1} parent=0
    _
  %s10 = ssub.s32 1, %s8
  %s11 = scalar_select 0, %s10, %s8
  $region1: #{tpu_custom_call.1} parent=0
    #allocation2 [shape = 'u8[4096]{0}', space=vmem, size = 0x1000, scoped, tag = 'output window, operand 0']
    #allocation3 [shape = 's32[2]{0}', space=sflag, size = 0x8, scoped, tag = 'scoped memory for tpu_custom_call.1']
    %12 = vsyncpa [#allocation3], 0
    %s13 = scalar_lea.sflag [#allocation3], 1
    %14 = vsyncpa %s13, 0
    loop: start=0, step=1, limit=6
    $region2: #{tpu_custom_call.1} parent=1 // loop_pre_header
      _
    $region3: #{tpu_custom_call.1} parent=1 // loop_header
      %s16 = sphi 0, %s20
      %p17 = scmp.ge.s32.totalorder %s16, 6
      %s26 = sphi 0, %s28
      %s29 = sphi 0, %s26
      %s30 = sphi 0, %s29
      %s46 = sphi 0, %s30
      %s50 = sphi 0, %s50
      %s52 = sphi 0, %s50
      %s53 = sphi 0, %s52
      %s67 = sphi 0, %s53
      %s71 = sphi 0, %s71
      %s73 = sphi 0, %s71
      %s74 = sphi 0, %s73
      %s88 = sphi 0, %s74
      %s92 = sphi 0, %s92
      %s94 = sphi 0, %s92
      %s95 = sphi 0, %s94
      %s109 = sphi 0, %s95
      %s113 = sphi 0, %s113
      %s115 = sphi 0, %s113
      %s116 = sphi 0, %s115
      %s130 = sphi 0, %s116
      %s134 = sphi 0, %s134
      %s136 = sphi 0, %s134
      %s137 = sphi 0, %s136
      %s151 = sphi 0, %s137
      %s155 = sphi 0, %s155
      %s157 = sphi 0, %s155
      %s158 = sphi 0, %s157
      %s172 = sphi 0, %s158
      %s178 = sphi 0, %s180
      %s181 = sphi 0, %s178
      %s182 = sphi 0, %s181
      %s198 = sphi 0, %s182
    $region4: #{tpu_custom_call.1} parent=1 // loop_header_branch
      %19 = sbr.rel (%p17) target = $region8
    $region5: #{tpu_custom_call.1} parent=1 // loop_body
      %s21 = ssub.s32 %s16, 1
      %s22 = ssub.s32 %s16, 2
      %s23 = sadd.s32 %s16, 1
      %s24 = ssub.s32 %s16, %s23
      %p25 = scmp.eq.s32.totalorder %s24, 0
      %s27 = sadd.s32 %s26, 1
      %s28 = scalar_select %p25, %s26, %s27
      %p31 = pneg %p25
      %p32 = scmp.eq.s32.totalorder %s16, 3
      %p33 = por %p31, %p32
      %p34 = scmp.ne.s32.totalorder %s26, %s29
      %p35 = scmp.eq.s32.totalorder %s16, 0
      %p36 = por %p34, %p35
      %p37 = scmp.ne.s32.totalorder %s26, %s29
      %p38 = scmp.eq.s32.totalorder %s21, 3
      %p39 = por %p37, %p38
      %p40 = scmp.ne.s32.totalorder %s29, %s30
      %p41 = scmp.eq.s32.totalorder %s21, 0
      %p42 = por %p40, %p41
      %p43 = scmp.ne.s32.totalorder %s29, %s30
      %p44 = scmp.eq.s32.totalorder %s22, 3
      %p45 = por %p43, %p44
      %p47 = scmp.ne.s32.totalorder %s30, %s46
      %p48 = scmp.eq.s32.totalorder %s22, 0
      %p49 = por %p47, %p48
      %s51 = sadd.s32 %s50, 1
      %p54 = scmp.eq.s32.totalorder %s16, 3
      %p55 = scmp.ne.s32.totalorder %s50, %s52
      %p56 = scmp.eq.s32.totalorder %s16, 0
      %p57 = por %p55, %p56
      %p58 = scmp.ne.s32.totalorder %s50, %s52
      %p59 = scmp.eq.s32.totalorder %s21, 3
      %p60 = por %p58, %p59
      %p61 = scmp.ne.s32.totalorder %s52, %s53
      %p62 = scmp.eq.s32.totalorder %s21, 0
      %p63 = por %p61, %p62
      %p64 = scmp.ne.s32.totalorder %s52, %s53
      %p65 = scmp.eq.s32.totalorder %s22, 3
      %p66 = por %p64, %p65
      %p68 = scmp.ne.s32.totalorder %s53, %s67
      %p69 = scmp.eq.s32.totalorder %s22, 0
      %p70 = por %p68, %p69
      %s72 = sadd.s32 %s71, 1
      %p75 = scmp.eq.s32.totalorder %s16, 3
      %p76 = scmp.ne.s32.totalorder %s71, %s73
      %p77 = scmp.eq.s32.totalorder %s16, 0
      %p78 = por %p76, %p77
      %p79 = scmp.ne.s32.totalorder %s71, %s73
      %p80 = scmp.eq.s32.totalorder %s21, 3
      %p81 = por %p79, %p80
      %p82 = scmp.ne.s32.totalorder %s73, %s74
      %p83 = scmp.eq.s32.totalorder %s21, 0
      %p84 = por %p82, %p83
      %p85 = scmp.ne.s32.totalorder %s73, %s74
      %p86 = scmp.eq.s32.totalorder %s22, 3
      %p87 = por %p85, %p86
      %p89 = scmp.ne.s32.totalorder %s74, %s88
      %p90 = scmp.eq.s32.totalorder %s22, 0
      %p91 = por %p89, %p90
      %s93 = sadd.s32 %s92, 1
      %p96 = scmp.eq.s32.totalorder %s16, 3
      %p97 = scmp.ne.s32.totalorder %s92, %s94
      %p98 = scmp.eq.s32.totalorder %s16, 0
      %p99 = por %p97, %p98
      %p100 = scmp.ne.s32.totalorder %s92, %s94
      %p101 = scmp.eq.s32.totalorder %s21, 3
      %p102 = por %p100, %p101
      %p103 = scmp.ne.s32.totalorder %s94, %s95
      %p104 = scmp.eq.s32.totalorder %s21, 0
      %p105 = por %p103, %p104
      %p106 = scmp.ne.s32.totalorder %s94, %s95
      %p107 = scmp.eq.s32.totalorder %s22, 3
      %p108 = por %p106, %p107
      %p110 = scmp.ne.s32.totalorder %s95, %s109
      %p111 = scmp.eq.s32.totalorder %s22, 0
      %p112 = por %p110, %p111
      %s114 = sadd.s32 %s113, 1
      %p117 = scmp.eq.s32.totalorder %s16, 3
      %p118 = scmp.ne.s32.totalorder %s113, %s115
      %p119 = scmp.eq.s32.totalorder %s16, 0
      %p120 = por %p118, %p119
      %p121 = scmp.ne.s32.totalorder %s113, %s115
      %p122 = scmp.eq.s32.totalorder %s21, 3
      %p123 = por %p121, %p122
      %p124 = scmp.ne.s32.totalorder %s115, %s116
      %p125 = scmp.eq.s32.totalorder %s21, 0
      %p126 = por %p124, %p125
      %p127 = scmp.ne.s32.totalorder %s115, %s116
      %p128 = scmp.eq.s32.totalorder %s22, 3
      %p129 = por %p127, %p128
      %p131 = scmp.ne.s32.totalorder %s116, %s130
      %p132 = scmp.eq.s32.totalorder %s22, 0
      %p133 = por %p131, %p132
      %s135 = sadd.s32 %s134, 1
      %p138 = scmp.eq.s32.totalorder %s16, 3
      %p139 = scmp.ne.s32.totalorder %s134, %s136
      %p140 = scmp.eq.s32.totalorder %s16, 0
      %p141 = por %p139, %p140
      %p142 = scmp.ne.s32.totalorder %s134, %s136
      %p143 = scmp.eq.s32.totalorder %s21, 3
      %p144 = por %p142, %p143
      %p145 = scmp.ne.s32.totalorder %s136, %s137
      %p146 = scmp.eq.s32.totalorder %s21, 0
      %p147 = por %p145, %p146
      %p148 = scmp.ne.s32.totalorder %s136, %s137
      %p149 = scmp.eq.s32.totalorder %s22, 3
      %p150 = por %p148, %p149
      %p152 = scmp.ne.s32.totalorder %s137, %s151
      %p153 = scmp.eq.s32.totalorder %s22, 0
      %p154 = por %p152, %p153
      %s156 = sadd.s32 %s155, 1
      %p159 = scmp.eq.s32.totalorder %s16, 3
      %p160 = scmp.ne.s32.totalorder %s155, %s157
      %p161 = scmp.eq.s32.totalorder %s16, 0
      %p162 = por %p160, %p161
      %p163 = scmp.ne.s32.totalorder %s155, %s157
      %p164 = scmp.eq.s32.totalorder %s21, 3
      %p165 = por %p163, %p164
      %p166 = scmp.ne.s32.totalorder %s157, %s158
      %p167 = scmp.eq.s32.totalorder %s21, 0
      %p168 = por %p166, %p167
      %p169 = scmp.ne.s32.totalorder %s157, %s158
      %p170 = scmp.eq.s32.totalorder %s22, 3
      %p171 = por %p169, %p170
      %p173 = scmp.ne.s32.totalorder %s158, %s172
      %p174 = scmp.eq.s32.totalorder %s22, 0
      %p175 = por %p173, %p174
      %s176 = ssub.s32 %s16, %s23
      %p177 = scmp.eq.s32.totalorder %s176, 0
      %s179 = sadd.s32 %s178, 1
      %s180 = scalar_select %p177, %s178, %s179
      %p183 = pneg %p177
      %p184 = scmp.eq.s32.totalorder %s16, 3
      %p185 = por %p183, %p184
      %p186 = scmp.ne.s32.totalorder %s178, %s181
      %p187 = scmp.eq.s32.totalorder %s16, 0
      %p188 = por %p186, %p187
      %p189 = scmp.ne.s32.totalorder %s178, %s181
      %p190 = scmp.eq.s32.totalorder %s21, 3
      %p191 = por %p189, %p190
      %p192 = scmp.ne.s32.totalorder %s181, %s182
      %p193 = scmp.eq.s32.totalorder %s21, 0
      %p194 = por %p192, %p193
      %p195 = scmp.ne.s32.totalorder %s181, %s182
      %p196 = scmp.eq.s32.totalorder %s22, 3
      %p197 = por %p195, %p196
      %p199 = scmp.ne.s32.totalorder %s182, %s198
      %p200 = scmp.eq.s32.totalorder %s22, 0
      %p201 = por %p199, %p200
      %p202 = scmp.le.s32.totalorder 1, %s16
      %p203 = scmp.lt.s32.totalorder %s16, 5
      %p204 = pnand %p202, %p203
      %p205 = pneg %p204
      // Predicated region
      $region9: #{tpu_custom_call.1} parent=5 // pred_check
        _
      $region10: #{tpu_custom_call.1} parent=5 // pred_check_branch
        %207 = sbr.rel (%p204) target = $region12
      $region11: #{tpu_custom_call.1} parent=5 // pred_region
        %s208 = ssub.s32 %s16, 1
        // Predicated region
        $region13: #{tpu_custom_call.1} parent=11 // pred_check
          %p209 = pneg %p63
        $region14: #{tpu_custom_call.1} parent=11 // pred_check_branch
          %211 = sbr.rel (%p209) target = $region16
        $region15: #{tpu_custom_call.1} parent=11 // pred_region
          _
        $region16: #{tpu_custom_call.1} parent=11 // pred_fallthru
          _
        // Predicated region
        $region17: #{tpu_custom_call.1} parent=11 // pred_check
          %p212 = pneg %p84
        $region18: #{tpu_custom_call.1} parent=11 // pred_check_branch
          %214 = sbr.rel (%p212) target = $region20
        $region19: #{tpu_custom_call.1} parent=11 // pred_region
          _
        $region20: #{tpu_custom_call.1} parent=11 // pred_fallthru
          _
        // Predicated region
        $region21: #{tpu_custom_call.1} parent=11 // pred_check
          %p215 = pneg %p105
        $region22: #{tpu_custom_call.1} parent=11 // pred_check_branch
          %217 = sbr.rel (%p215) target = $region24
        $region23: #{tpu_custom_call.1} parent=11 // pred_region
          _
        $region24: #{tpu_custom_call.1} parent=11 // pred_fallthru
          _
        // Predicated region
        $region25: #{tpu_custom_call.1} parent=11 // pred_check
          %p218 = pneg %p126
        $region26: #{tpu_custom_call.1} parent=11 // pred_check_branch
          %220 = sbr.rel (%p218) target = $region28
        $region27: #{tpu_custom_call.1} parent=11 // pred_region
          _
        $region28: #{tpu_custom_call.1} parent=11 // pred_fallthru
          _
        // Predicated region
        $region29: #{tpu_custom_call.1} parent=11 // pred_check
          %p221 = pneg %p147
        $region30: #{tpu_custom_call.1} parent=11 // pred_check_branch
          %223 = sbr.rel (%p221) target = $region32
        $region31: #{tpu_custom_call.1} parent=11 // pred_region
          _
        $region32: #{tpu_custom_call.1} parent=11 // pred_fallthru
          _
        // Predicated region
        $region33: #{tpu_custom_call.1} parent=11 // pred_check
          %p224 = pneg %p168
        $region34: #{tpu_custom_call.1} parent=11 // pred_check_branch
          %226 = sbr.rel (%p224) target = $region36
        $region35: #{tpu_custom_call.1} parent=11 // pred_region
          _
        $region36: #{tpu_custom_call.1} parent=11 // pred_fallthru
          _
      $region12: #{tpu_custom_call.1} parent=5 // pred_fallthru
        _
      %p227 = scmp.lt.s32.totalorder %s16, 4
      // Predicated region
      $region37: #{tpu_custom_call.1} parent=5 // pred_check
        %p228 = pneg %p227
      $region38: #{tpu_custom_call.1} parent=5 // pred_check_branch
        %230 = sbr.rel (%p228) target = $region40
      $region39: #{tpu_custom_call.1} parent=5 // pred_region
        // Predicated region
        $region41: #{tpu_custom_call.1} parent=39 // pred_check
          %p231 = pneg %p36
        $region42: #{tpu_custom_call.1} parent=39 // pred_check_branch
          %233 = sbr.rel (%p231) target = $region44
        $region43: #{tpu_custom_call.1} parent=39 // pred_region
          %s234 = smul.u32 16, %s16
          %p235 = scmp.lt.s32.totalorder %s234, 63
          %s236 = scalar_select %p235, %s234, 63
          %s237 = smul.addr %s236, 8
          %s238 = scalar_lea.vmem %s0, %s237
          %s239 = smul.u32 16, %s16
        $region44: #{tpu_custom_call.1} parent=39 // pred_fallthru
          _
      $region40: #{tpu_custom_call.1} parent=5 // pred_fallthru
        _
      %p240 = scmp.le.s32.totalorder 1, %s16
      %p241 = scmp.lt.s32.totalorder %s16, 5
      %p242 = pnand %p240, %p241
      %p243 = pneg %p242
      // Predicated region
      $region45: #{tpu_custom_call.1} parent=5 // pred_check
        _
      $region46: #{tpu_custom_call.1} parent=5 // pred_check_branch
        %245 = sbr.rel (%p242) target = $region48
      $region47: #{tpu_custom_call.1} parent=5 // pred_region
        %s246 = ssub.s32 %s16, 1
        %s247 = smul.u32 16, %s21
        %p248 = scmp.lt.s32.totalorder %s247, 63
        %s249 = scalar_select %p248, %s247, 63
        %s250 = smul.addr %s249, 8
        %s251 = scalar_lea.vmem %s0, %s250
        %p252 = pneg %p42
        %p253 = pneg %p39
        %p254 = pneg %p63
        %p255 = pneg %p60
        %p256 = pneg %p84
        %p257 = pneg %p81
        %p258 = pneg %p105
        %p259 = pneg %p102
        %p260 = pneg %p126
        %p261 = pneg %p123
        %p262 = pneg %p147
        %p263 = pneg %p144
        %p264 = pneg %p168
        %p265 = pneg %p165
        %p266 = pneg %p194
        %p267 = pneg %p191
        %s268 = sand.u32 %s181, 1
        %s269 = scalar_lea.sflag [#allocation3], %s268
        %s270 = sand.u32 %s181, 1
        %s271 = smul.addr %s270, 4
        %s272 = scalar_lea.vmem [#allocation2], %s271
        %s273 = smul.u32 16, %s21
        %p274 = scmp.lt.s32.totalorder %s273, 63
        %s275 = scalar_select %p274, %s273, 63
        %s276 = smul.addr %s275, 8
        %s277 = scalar_lea.vmem %s0, %s276
        %s278 = smul.u32 16, %s21
        %v280 = vld [vmem:[%s277] sm:$0xff]
        %v281 = vld [vmem:[%s277 + $0x8] sm:$0xff]
        %v282 = vld [vmem:[%s277 + $0x10] sm:$0xff]
        %v283 = vld [vmem:[%s277 + $0x18] sm:$0xff]
        %v284 = vld [vmem:[%s277 + $0x20] sm:$0xff]
        %v285 = vld [vmem:[%s277 + $0x28] sm:$0xff]
        %v286 = vld [vmem:[%s277 + $0x30] sm:$0xff]
        %v287 = vld [vmem:[%s277 + $0x38] sm:$0xff]
        %v288 = vld [vmem:[%s277 + $0x40] sm:$0xff]
        %v289 = vld [vmem:[%s277 + $0x48] sm:$0xff]
        %v290 = vld [vmem:[%s277 + $0x50] sm:$0xff]
        %v291 = vld [vmem:[%s277 + $0x58] sm:$0xff]
        %v292 = vld [vmem:[%s277 + $0x60] sm:$0xff]
        %v293 = vld [vmem:[%s277 + $0x68] sm:$0xff]
        %v294 = vld [vmem:[%s277 + $0x70] sm:$0xff]
        %v295 = vld [vmem:[%s277 + $0x78] sm:$0xff]
        %v296 = vpack.c.bf16 %v281, %v280
        %v297 = vpack.c.bf16 %v283, %v282
        %v298 = vpack.c.bf16 %v285, %v284
        %v299 = vpack.c.bf16 %v287, %v286
        %v300 = vpack.c.bf16 %v289, %v288
        %v301 = vpack.c.bf16 %v291, %v290
        %v302 = vpack.c.bf16 %v293, %v292
        %v303 = vpack.c.bf16 %v295, %v294
        %v304 = vld [vmem:[%s1] sm:$0xf]
        %v305 = vld [vmem:[%s1 + $0x4] sm:$0xf]
        %v306 = vld [vmem:[%s1 + $0x8] sm:$0xf]
        %v307 = vld [vmem:[%s1 + $0xc] sm:$0xf]
        %v308 = vld [vmem:[%s1 + $0x10] sm:$0xf]
        %v309 = vld [vmem:[%s1 + $0x14] sm:$0xf]
        %v310 = vld [vmem:[%s1 + $0x18] sm:$0xf]
        %v311 = vld [vmem:[%s1 + $0x1c] sm:$0xf]
        %v312 = vld [vmem:[%s2] sm:$0xff]
        %v313 = vld [vmem:[%s2 + $0x8] sm:$0xff]
        %v314 = vld [vmem:[%s2 + $0x10] sm:$0xff]
        %v315 = vld [vmem:[%s2 + $0x18] sm:$0xff]
        %v316 = vld [vmem:[%s2 + $0x20] sm:$0xff]
        %v317 = vld [vmem:[%s2 + $0x28] sm:$0xff]
        %v318 = vld [vmem:[%s2 + $0x30] sm:$0xff]
        %v319 = vld [vmem:[%s2 + $0x38] sm:$0xff]
        %321 = vset.pattern.permute.xlu0 0
        %322 = vperm.xlu0 %321, %v312
        %v323 = vpop.permute.xlu0 %322
        %326 = vset.pattern.permute.xlu0 0
        %327 = vperm.xlu0 %326, %v313
        %v328 = vpop.permute.xlu0 %327
        %331 = vset.pattern.permute.xlu0 0
        %332 = vperm.xlu0 %331, %v314
        %v333 = vpop.permute.xlu0 %332
        %336 = vset.pattern.permute.xlu0 0
        %337 = vperm.xlu0 %336, %v315
        %v338 = vpop.permute.xlu0 %337
        %341 = vset.pattern.permute.xlu0 0
        %342 = vperm.xlu0 %341, %v316
        %v343 = vpop.permute.xlu0 %342
        %346 = vset.pattern.permute.xlu0 0
        %347 = vperm.xlu0 %346, %v317
        %v348 = vpop.permute.xlu0 %347
        %351 = vset.pattern.permute.xlu0 0
        %352 = vperm.xlu0 %351, %v318
        %v353 = vpop.permute.xlu0 %352
        %356 = vset.pattern.permute.xlu0 0
        %357 = vperm.xlu0 %356, %v319
        %v358 = vpop.permute.xlu0 %357
        %v368 = vunpack.c.l.b16 %v304
        %v369 = vunpack.c.l.b16 %v305
        %v370 = vunpack.c.l.b16 %v306
        %v371 = vunpack.c.l.b16 %v307
        %v372 = vunpack.c.l.b16 %v308
        %v373 = vunpack.c.l.b16 %v309
        %v374 = vunpack.c.l.b16 %v310
        %v375 = vunpack.c.l.b16 %v311
        %v376 = vpack.c.b16 %v369, %v368
        %v377 = vpack.c.b16 %v371, %v370
        %v378 = vpack.c.b16 %v373, %v372
        %v379 = vpack.c.b16 %v375, %v374
        %vm380 = vcmask 596992
        %v382 = vsel %vm380, %v376, 0
        %v385 = vsel %vm380, %v377, 0
        %v388 = vsel %vm380, %v378, 0
        %v391 = vsel %vm380, %v379, 0
        %v394 = vsel %vm380, %v296, 0
        %v397 = vsel %vm380, %v297, 0
        %v400 = vsel %vm380, %v298, 0
        %v403 = vsel %vm380, %v299, 0
        %v406 = vsel %vm380, %v300, 0
        %v409 = vsel %vm380, %v301, 0
        %v412 = vsel %vm380, %v302, 0
        %v415 = vsel %vm380, %v303, 0
        %417 = vmatprep.subr.bf16.mxu0 0
        %418 = vmatpush1.bf16.xpose.msra.mxu0 %v394
        %419 = vmatprep.subr.bf16.mxu0 0
        %420 = vmatpush1.bf16.xpose.msra.mxu0 %v397
        %421 = vmatprep.subr.bf16.mxu0 0
        %422 = vmatpush1.bf16.xpose.msra.mxu0 %v400
        %423 = vmatprep.subr.bf16.mxu0 0
        %424 = vmatpush1.bf16.xpose.msra.mxu0 %v403
        %425 = vmatprep.subr.bf16.mxu0 0
        %426 = vmatpush1.bf16.xpose.msra.mxu0 %v406
        %427 = vmatprep.subr.bf16.mxu0 0
        %428 = vmatpush1.bf16.xpose.msra.mxu0 %v409
        %429 = vmatprep.subr.bf16.mxu0 0
        %430 = vmatpush1.bf16.xpose.msra.mxu0 %v412
        %431 = vmatprep.subr.bf16.mxu0 0
        %432 = vmatpush1.bf16.xpose.msra.mxu0 %v415
        %433 = vmatprep.subr.bf16.mxu0 0
        %434 = vmatpush1.bf16.xpose.msra.mxu0 0
        %435 = vmatprep.subr.bf16.mxu0 0
        %436 = vmatpush1.bf16.xpose.msra.mxu0 0
        %437 = vmatprep.subr.bf16.mxu0 0
        %438 = vmatpush1.bf16.xpose.msra.mxu0 0
        %439 = vmatprep.subr.bf16.mxu0 0
        %440 = vmatpush1.bf16.xpose.msra.mxu0 0
        %441 = vmatprep.subr.bf16.mxu0 0
        %442 = vmatpush1.bf16.xpose.msra.mxu0 0
        %443 = vmatprep.subr.bf16.mxu0 0
        %444 = vmatpush1.bf16.xpose.msra.mxu0 0
        %445 = vmatprep.subr.bf16.mxu0 0
        %446 = vmatpush1.bf16.xpose.msra.mxu0 0
        %447 = vmatprep.subr.bf16.mxu0 0
        %448 = vmatpush1.bf16.xpose.msra.mxu0 0
        %449 = vmatprep.mubr.bf16.mxu0 0
        %450 = vmatmul.mubr.bf16.gmra.mrb[0].mxu0 %v382
        %v451 = vpop.f32.mrb[0].mxu0
        %v452 = vadd.f32 %v323, %v451
        %v453 = vpop.f32.mrb[0].mxu0
        %v454 = vpop.f32.mrb[0].mxu0
        %v455 = vadd.f32 %v328, %v454
        %v456 = vpop.f32.mrb[0].mxu0
        %457 = vmatprep.mubr.bf16.mxu0 0
        %458 = vmatmul.mubr.bf16.gmra.mrb[0].mxu0 %v385
        %v459 = vpop.f32.mrb[0].mxu0
        %v460 = vadd.f32 %v333, %v459
        %v461 = vpop.f32.mrb[0].mxu0
        %v462 = vpop.f32.mrb[0].mxu0
        %v463 = vadd.f32 %v338, %v462
        %v464 = vpop.f32.mrb[0].mxu0
        %465 = vmatprep.mubr.bf16.mxu0 0
        %466 = vmatmul.mubr.bf16.gmra.mrb[0].mxu0 %v388
        %v467 = vpop.f32.mrb[0].mxu0
        %v468 = vadd.f32 %v343, %v467
        %v469 = vpop.f32.mrb[0].mxu0
        %v470 = vpop.f32.mrb[0].mxu0
        %v471 = vadd.f32 %v348, %v470
        %v472 = vpop.f32.mrb[0].mxu0
        %473 = vmatprep.mubr.bf16.mxu0 0
        %474 = vmatmul.mubr.bf16.gmra.mrb[0].mxu0 %v391
        %v475 = vpop.f32.mrb[0].mxu0
        %v476 = vadd.f32 %v353, %v475
        %v477 = vpop.f32.mrb[0].mxu0
        %v478 = vpop.f32.mrb[0].mxu0
        %v479 = vadd.f32 %v358, %v478
        %v480 = vpop.f32.mrb[0].mxu0
        %481 = vdwg.mxu0
        %v482 = vmul.f32 %v452, 0.5
        %v483 = vmul.f32 %v455, 0.5
        %v484 = vmul.f32 %v460, 0.5
        %v485 = vmul.f32 %v463, 0.5
        %v486 = vmul.f32 %v468, 0.5
        %v487 = vmul.f32 %v471, 0.5
        %v488 = vmul.f32 %v476, 0.5
        %v489 = vmul.f32 %v479, 0.5
        %v490 = vmul.f32 %v452, %v452
        %v491 = vmul.f32 %v455, %v455
        %v492 = vmul.f32 %v460, %v460
        %v493 = vmul.f32 %v463, %v463
        %v494 = vmul.f32 %v468, %v468
        %v495 = vmul.f32 %v471, %v471
        %v496 = vmul.f32 %v476, %v476
        %v497 = vmul.f32 %v479, %v479
        %v498 = vmul.f32 %v490, %v452
        %v499 = vmul.f32 %v491, %v455
        %v500 = vmul.f32 %v492, %v460
        %v501 = vmul.f32 %v493, %v463
        %v502 = vmul.f32 %v494, %v468
        %v503 = vmul.f32 %v495, %v471
        %v504 = vmul.f32 %v496, %v476
        %v505 = vmul.f32 %v497, %v479
        %v506 = vmul.f32 %v498, 0.044715
        %v507 = vmul.f32 %v499, 0.044715
        %v508 = vmul.f32 %v500, 0.044715
        %v509 = vmul.f32 %v501, 0.044715
        %v510 = vmul.f32 %v502, 0.044715
        %v511 = vmul.f32 %v503, 0.044715
        %v512 = vmul.f32 %v504, 0.044715
        %v513 = vmul.f32 %v505, 0.044715
        %v514 = vadd.f32 %v452, %v506
        %v515 = vadd.f32 %v455, %v507
        %v516 = vadd.f32 %v460, %v508
        %v517 = vadd.f32 %v463, %v509
        %v518 = vadd.f32 %v468, %v510
        %v519 = vadd.f32 %v471, %v511
        %v520 = vadd.f32 %v476, %v512
        %v521 = vadd.f32 %v479, %v513
        %v522 = vmul.f32 %v514, 0.7978846
        %v523 = vmul.f32 %v515, 0.7978846
        %v524 = vmul.f32 %v516, 0.7978846
        %v525 = vmul.f32 %v517, 0.7978846
        %v526 = vmul.f32 %v518, 0.7978846
        %v527 = vmul.f32 %v519, 0.7978846
        %v528 = vmul.f32 %v520, 0.7978846
        %v529 = vmul.f32 %v521, 0.7978846
        %v530 = vtanh.pop %v522
        %v531 = vtanh.pop %v523
        %v532 = vtanh.pop %v524
        %v533 = vtanh.pop %v525
        %v534 = vtanh.pop %v526
        %v535 = vtanh.pop %v527
        %v536 = vtanh.pop %v528
        %v537 = vtanh.pop %v529
        %v538 = vadd.f32 %v530, 1.0
        %v539 = vadd.f32 %v531, 1.0
        %v540 = vadd.f32 %v532, 1.0
        %v541 = vadd.f32 %v533, 1.0
        %v542 = vadd.f32 %v534, 1.0
        %v543 = vadd.f32 %v535, 1.0
        %v544 = vadd.f32 %v536, 1.0
        %v545 = vadd.f32 %v537, 1.0
        %v546 = vmul.f32 %v482, %v538
        %v547 = vmul.f32 %v483, %v539
        %v548 = vmul.f32 %v484, %v540
        %v549 = vmul.f32 %v485, %v541
        %v550 = vmul.f32 %v486, %v542
        %v551 = vmul.f32 %v487, %v543
        %v552 = vmul.f32 %v488, %v544
        %v553 = vmul.f32 %v489, %v545
        %v554 = vld [vmem:[%s3] sm:$0xf]
        %v555 = vld [vmem:[%s3 + $0x4] sm:$0xf]
        %v556 = vld [vmem:[%s3 + $0x8] sm:$0xf]
        %v557 = vld [vmem:[%s3 + $0xc] sm:$0xf]
        %v558 = vld [vmem:[%s3 + $0x10] sm:$0xf]
        %v559 = vld [vmem:[%s3 + $0x14] sm:$0xf]
        %v560 = vld [vmem:[%s3 + $0x18] sm:$0xf]
        %v561 = vld [vmem:[%s3 + $0x1c] sm:$0xf]
        %v562 = vpack.c.bf16 %v547, %v546
        %v563 = vpack.c.bf16 %v549, %v548
        %v564 = vpack.c.bf16 %v551, %v550
        %v565 = vpack.c.bf16 %v553, %v552
        %v566 = vld [vmem:[%s4] sm:$0xff]
        %v567 = vld [vmem:[%s4 + $0x8] sm:$0xff]
        %v568 = vld [vmem:[%s4 + $0x10] sm:$0xff]
        %v569 = vld [vmem:[%s4 + $0x18] sm:$0xff]
        %v570 = vld [vmem:[%s4 + $0x20] sm:$0xff]
        %v571 = vld [vmem:[%s4 + $0x28] sm:$0xff]
        %v572 = vld [vmem:[%s4 + $0x30] sm:$0xff]
        %v573 = vld [vmem:[%s4 + $0x38] sm:$0xff]
        %575 = vset.pattern.permute.xlu0 0
        %576 = vperm.xlu0 %575, %v566
        %v577 = vpop.permute.xlu0 %576
        %580 = vset.pattern.permute.xlu0 0
        %581 = vperm.xlu0 %580, %v567
        %v582 = vpop.permute.xlu0 %581
        %585 = vset.pattern.permute.xlu0 0
        %586 = vperm.xlu0 %585, %v568
        %v587 = vpop.permute.xlu0 %586
        %590 = vset.pattern.permute.xlu0 0
        %591 = vperm.xlu0 %590, %v569
        %v592 = vpop.permute.xlu0 %591
        %595 = vset.pattern.permute.xlu0 0
        %596 = vperm.xlu0 %595, %v570
        %v597 = vpop.permute.xlu0 %596
        %600 = vset.pattern.permute.xlu0 0
        %601 = vperm.xlu0 %600, %v571
        %v602 = vpop.permute.xlu0 %601
        %605 = vset.pattern.permute.xlu0 0
        %606 = vperm.xlu0 %605, %v572
        %v607 = vpop.permute.xlu0 %606
        %610 = vset.pattern.permute.xlu0 0
        %611 = vperm.xlu0 %610, %v573
        %v612 = vpop.permute.xlu0 %611
        %v622 = vunpack.c.l.b16 %v554
        %v623 = vunpack.c.l.b16 %v555
        %v624 = vunpack.c.l.b16 %v556
        %v625 = vunpack.c.l.b16 %v557
        %v626 = vunpack.c.l.b16 %v558
        %v627 = vunpack.c.l.b16 %v559
        %v628 = vunpack.c.l.b16 %v560
        %v629 = vunpack.c.l.b16 %v561
        %v630 = vpack.c.b16 %v623, %v622
        %v631 = vpack.c.b16 %v625, %v624
        %v632 = vpack.c.b16 %v627, %v626
        %v633 = vpack.c.b16 %v629, %v628
        %vm634 = vcmask 523264
        %v636 = vsel %vm634, %v630, 0
        %v639 = vsel %vm634, %v631, 0
        %v642 = vsel %vm634, %v632, 0
        %v645 = vsel %vm634, %v633, 0
        %647 = vmatprep.subr.bf16.mxu0 0
        %648 = vmatpush1.bf16.msra.mxu0 %v562
        %649 = vmatprep.subr.bf16.mxu0 0
        %650 = vmatpush1.bf16.msra.mxu0 %v563
        %651 = vmatprep.subr.bf16.mxu0 0
        %652 = vmatpush1.bf16.msra.mxu0 %v564
        %653 = vmatprep.subr.bf16.mxu0 0
        %654 = vmatpush1.bf16.msra.mxu0 %v565
        %655 = vmatprep.subr.bf16.mxu0 0
        %656 = vmatpush1.bf16.msra.mxu0 0
        %657 = vmatprep.subr.bf16.mxu0 0
        %658 = vmatpush1.bf16.msra.mxu0 0
        %659 = vmatprep.subr.bf16.mxu0 0
        %660 = vmatpush1.bf16.msra.mxu0 0
        %661 = vmatprep.subr.bf16.mxu0 0
        %662 = vmatpush1.bf16.msra.mxu0 0
        %663 = vmatprep.subr.bf16.mxu0 0
        %664 = vmatpush1.bf16.msra.mxu0 0
        %665 = vmatprep.subr.bf16.mxu0 0
        %666 = vmatpush1.bf16.msra.mxu0 0
        %667 = vmatprep.subr.bf16.mxu0 0
        %668 = vmatpush1.bf16.msra.mxu0 0
        %669 = vmatprep.subr.bf16.mxu0 0
        %670 = vmatpush1.bf16.msra.mxu0 0
        %671 = vmatprep.subr.bf16.mxu0 0
        %672 = vmatpush1.bf16.msra.mxu0 0
        %673 = vmatprep.subr.bf16.mxu0 0
        %674 = vmatpush1.bf16.msra.mxu0 0
        %675 = vmatprep.subr.bf16.mxu0 0
        %676 = vmatpush1.bf16.msra.mxu0 0
        %677 = vmatprep.subr.bf16.mxu0 0
        %678 = vmatpush1.bf16.msra.mxu0 0
        %679 = vmatprep.mubr.bf16.mxu0 0
        %680 = vmatmul.mubr.bf16.gmra.mrb[0].mxu0 %v636
        %v681 = vpop.f32.mrb[0].mxu0
        %v682 = vadd.f32 %v577, %v681
        %v683 = vpop.f32.mrb[0].mxu0
        %v684 = vpop.f32.mrb[0].mxu0
        %v685 = vadd.f32 %v582, %v684
        %v686 = vpop.f32.mrb[0].mxu0
        %687 = vmatprep.mubr.bf16.mxu0 0
        %688 = vmatmul.mubr.bf16.gmra.mrb[0].mxu0 %v639
        %v689 = vpop.f32.mrb[0].mxu0
        %v690 = vadd.f32 %v587, %v689
        %v691 = vpop.f32.mrb[0].mxu0
        %v692 = vpop.f32.mrb[0].mxu0
        %v693 = vadd.f32 %v592, %v692
        %v694 = vpop.f32.mrb[0].mxu0
        %695 = vmatprep.mubr.bf16.mxu0 0
        %696 = vmatmul.mubr.bf16.gmra.mrb[0].mxu0 %v642
        %v697 = vpop.f32.mrb[0].mxu0
        %v698 = vadd.f32 %v597, %v697
        %v699 = vpop.f32.mrb[0].mxu0
        %v700 = vpop.f32.mrb[0].mxu0
        %v701 = vadd.f32 %v602, %v700
        %v702 = vpop.f32.mrb[0].mxu0
        %703 = vmatprep.mubr.bf16.mxu0 0
        %704 = vmatmul.mubr.bf16.gmra.mrb[0].mxu0 %v645
        %v705 = vpop.f32.mrb[0].mxu0
        %v706 = vadd.f32 %v607, %v705
        %v707 = vpop.f32.mrb[0].mxu0
        %v708 = vpop.f32.mrb[0].mxu0
        %v709 = vadd.f32 %v612, %v708
        %v710 = vpop.f32.mrb[0].mxu0
        %711 = vdwg.mxu0
        %v712 = vmul.f32 %v682, 0.5
        %v713 = vmul.f32 %v685, 0.5
        %v714 = vmul.f32 %v690, 0.5
        %v715 = vmul.f32 %v693, 0.5
        %v716 = vmul.f32 %v698, 0.5
        %v717 = vmul.f32 %v701, 0.5
        %v718 = vmul.f32 %v706, 0.5
        %v719 = vmul.f32 %v709, 0.5
        %v720 = vmul.f32 %v682, %v682
        %v721 = vmul.f32 %v685, %v685
        %v722 = vmul.f32 %v690, %v690
        %v723 = vmul.f32 %v693, %v693
        %v724 = vmul.f32 %v698, %v698
        %v725 = vmul.f32 %v701, %v701
        %v726 = vmul.f32 %v706, %v706
        %v727 = vmul.f32 %v709, %v709
        %v728 = vmul.f32 %v720, %v682
        %v729 = vmul.f32 %v721, %v685
        %v730 = vmul.f32 %v722, %v690
        %v731 = vmul.f32 %v723, %v693
        %v732 = vmul.f32 %v724, %v698
        %v733 = vmul.f32 %v725, %v701
        %v734 = vmul.f32 %v726, %v706
        %v735 = vmul.f32 %v727, %v709
        %v736 = vmul.f32 %v728, 0.044715
        %v737 = vmul.f32 %v729, 0.044715
        %v738 = vmul.f32 %v730, 0.044715
        %v739 = vmul.f32 %v731, 0.044715
        %v740 = vmul.f32 %v732, 0.044715
        %v741 = vmul.f32 %v733, 0.044715
        %v742 = vmul.f32 %v734, 0.044715
        %v743 = vmul.f32 %v735, 0.044715
        %v744 = vadd.f32 %v682, %v736
        %v745 = vadd.f32 %v685, %v737
        %v746 = vadd.f32 %v690, %v738
        %v747 = vadd.f32 %v693, %v739
        %v748 = vadd.f32 %v698, %v740
        %v749 = vadd.f32 %v701, %v741
        %v750 = vadd.f32 %v706, %v742
        %v751 = vadd.f32 %v709, %v743
        %v752 = vmul.f32 %v744, 0.7978846
        %v753 = vmul.f32 %v745, 0.7978846
        %v754 = vmul.f32 %v746, 0.7978846
        %v755 = vmul.f32 %v747, 0.7978846
        %v756 = vmul.f32 %v748, 0.7978846
        %v757 = vmul.f32 %v749, 0.7978846
        %v758 = vmul.f32 %v750, 0.7978846
        %v759 = vmul.f32 %v751, 0.7978846
        %v760 = vtanh.pop %v752
        %v761 = vtanh.pop %v753
        %v762 = vtanh.pop %v754
        %v763 = vtanh.pop %v755
        %v764 = vtanh.pop %v756
        %v765 = vtanh.pop %v757
        %v766 = vtanh.pop %v758
        %v767 = vtanh.pop %v759
        %v768 = vadd.f32 %v760, 1.0
        %v769 = vadd.f32 %v761, 1.0
        %v770 = vadd.f32 %v762, 1.0
        %v771 = vadd.f32 %v763, 1.0
        %v772 = vadd.f32 %v764, 1.0
        %v773 = vadd.f32 %v765, 1.0
        %v774 = vadd.f32 %v766, 1.0
        %v775 = vadd.f32 %v767, 1.0
        %v776 = vmul.f32 %v712, %v768
        %v777 = vmul.f32 %v713, %v769
        %v778 = vmul.f32 %v714, %v770
        %v779 = vmul.f32 %v715, %v771
        %v780 = vmul.f32 %v716, %v772
        %v781 = vmul.f32 %v717, %v773
        %v782 = vmul.f32 %v718, %v774
        %v783 = vmul.f32 %v719, %v775
        %v784 = vld [vmem:[%s5] sm:$0x3]
        %v785 = vpack.c.bf16 %v777, %v776
        %v786 = vpack.c.bf16 %v779, %v778
        %v787 = vpack.c.bf16 %v781, %v780
        %v788 = vpack.c.bf16 %v783, %v782
        %v789 = vld [vmem:[%s6] sm:$0x7]
        %791 = vset.pattern.permute.xlu0 0
        %792 = vperm.xlu0 %791, %v789
        %v793 = vpop.permute.xlu0 %792
        %v796 = vsel %vm634, %v784, 0
        %798 = vmatprep.subr.bf16.mxu0 0
        %799 = vmatpush1.bf16.msra.mxu0 %v785
        %800 = vmatprep.subr.bf16.mxu0 0
        %801 = vmatpush1.bf16.msra.mxu0 %v786
        %802 = vmatprep.subr.bf16.mxu0 0
        %803 = vmatpush1.bf16.msra.mxu0 %v787
        %804 = vmatprep.subr.bf16.mxu0 0
        %805 = vmatpush1.bf16.msra.mxu0 %v788
        %806 = vmatprep.subr.bf16.mxu0 0
        %807 = vmatpush1.bf16.msra.mxu0 0
        %808 = vmatprep.subr.bf16.mxu0 0
        %809 = vmatpush1.bf16.msra.mxu0 0
        %810 = vmatprep.subr.bf16.mxu0 0
        %811 = vmatpush1.bf16.msra.mxu0 0
        %812 = vmatprep.subr.bf16.mxu0 0
        %813 = vmatpush1.bf16.msra.mxu0 0
        %814 = vmatprep.subr.bf16.mxu0 0
        %815 = vmatpush1.bf16.msra.mxu0 0
        %816 = vmatprep.subr.bf16.mxu0 0
        %817 = vmatpush1.bf16.msra.mxu0 0
        %818 = vmatprep.subr.bf16.mxu0 0
        %819 = vmatpush1.bf16.msra.mxu0 0
        %820 = vmatprep.subr.bf16.mxu0 0
        %821 = vmatpush1.bf16.msra.mxu0 0
        %822 = vmatprep.subr.bf16.mxu0 0
        %823 = vmatpush1.bf16.msra.mxu0 0
        %824 = vmatprep.subr.bf16.mxu0 0
        %825 = vmatpush1.bf16.msra.mxu0 0
        %826 = vmatprep.subr.bf16.mxu0 0
        %827 = vmatpush1.bf16.msra.mxu0 0
        %828 = vmatprep.subr.bf16.mxu0 0
        %829 = vmatpush1.bf16.msra.mxu0 0
        %830 = vmatprep.mubr.bf16.mxu0 0
        %831 = vmatmul.mubr.bf16.gmra.mrb[0].mxu0 %v796
        %v832 = vpop.f32.mrb[0].mxu0
        %v833 = vadd.f32 %v793, %v832
        %v834 = vpop.f32.mrb[0].mxu0
        %v835 = vpop.f32.mrb[0].mxu0
        %v836 = vpop.f32.mrb[0].mxu0
        %837 = vdwg.mxu0
        %v838 = vxor.u32 %v833, 2147483648
        %v839 = vmul.f32 %v838, 1.442695
        %v840 = vpow.pop %v839
        %v841 = vadd.f32 %v840, 1.0
        %v842 = vrcp.pop %v841
        %v843 = vmul.f32 1.0, %v842
        %844 = vst [vmem:[%s272] sm:$0x7] %v843
        %s845 = sand.u32 %s181, 1
        %s846 = scalar_lea.sflag [#allocation3], %s845
        %s847 = sand.u32 %s181, 1
        %s848 = smul.addr %s847, 4
        %s849 = scalar_lea.vmem [#allocation2], %s848
        // Predicated region
        $region49: #{tpu_custom_call.1} parent=47 // pred_check
          %p850 = pneg %p191
        $region50: #{tpu_custom_call.1} parent=47 // pred_check_branch
          %852 = sbr.rel (%p850) target = $region52
        $region51: #{tpu_custom_call.1} parent=47 // pred_region
          %s854 = ssub.s32 64, 64
          %855 = vsyncadd %s846, %s854
          %s856 = smul.addr %s21, 64
          %s857 = scalar_lea.hbm %s7, %s856
          %s859 = sshll.u32 %s849, 4
          %s860 = int_to_ptr.vmem [resolvable:$true] %s859
          %862 = dma.vmem_to_hbm [thread:$0]  %s860, 64, %s857, %s846
        $region52: #{tpu_custom_call.1} parent=47 // pred_fallthru
          _
      $region48: #{tpu_custom_call.1} parent=5 // pred_fallthru
        _
      %p863 = scmp.le.s32.totalorder 2, %s16
      // Predicated region
      $region53: #{tpu_custom_call.1} parent=5 // pred_check
        %p864 = pneg %p863
      $region54: #{tpu_custom_call.1} parent=5 // pred_check_branch
        %866 = sbr.rel (%p864) target = $region56
      $region55: #{tpu_custom_call.1} parent=5 // pred_region
        %s867 = ssub.s32 %s16, 2
        // Predicated region
        $region57: #{tpu_custom_call.1} parent=55 // pred_check
          %p868 = pneg %p197
        $region58: #{tpu_custom_call.1} parent=55 // pred_check_branch
          %870 = sbr.rel (%p868) target = $region60
        $region59: #{tpu_custom_call.1} parent=55 // pred_region
          %s871 = sand.u32 %s182, 1
          %s872 = scalar_lea.sflag [#allocation3], %s871
          %s873 = sand.u32 %s182, 1
          %s874 = smul.addr %s873, 4
          %s875 = scalar_lea.vmem [#allocation2], %s874
          %876 = dma.done %s872, 64
        $region60: #{tpu_custom_call.1} parent=55 // pred_fallthru
          _
      $region56: #{tpu_custom_call.1} parent=5 // pred_fallthru
        _
    $region6: #{tpu_custom_call.1} parent=1 // loop_footer
      %s20 = sadd.s32 1, %s16
    $region7: #{tpu_custom_call.1} parent=1 // loop_footer_branch
      %15 = sbr.rel target = $region3
    $region8: #{tpu_custom_call.1} parent=1 // loop_exit
      _
    %877 = vsyncpa [#allocation3], 1
    %s878 = scalar_lea.sflag [#allocation3], 1
    %879 = vsyncpa %s878, 1

</llo_original>
